<compile_context>
chip_gen: v6e
topology: v6e:2x2x1
jax: 0.10.0
libtpu: 0.0.40
codegen_flags: <defaults>
</compile_context>

<pallas_src>
import functools

import jax
import jax.numpy as jnp
from jax import lax
from jax.experimental import pallas as pl
from jax.experimental.pallas import tpu as pltpu

LANE = 128
ACC_ROWS = 8                 # vreg-height partial accumulators
DEFAULT_TILE_ROWS = 4096     # (4096, 128) f32 block = 2 MiB per input per buffer


def _iou_bce_kernel(n_ref, x_ref, t_ref, out_ref,
                    inter_acc, total_acc, bce_acc, *, tile_rows):
    i = pl.program_id(0)

    @pl.when(i == 0)
    def _init():
        inter_acc[...] = jnp.zeros_like(inter_acc)
        total_acc[...] = jnp.zeros_like(total_acc)
        bce_acc[...] = jnp.zeros_like(bce_acc)

    n = n_ref[0]
    block_elems = tile_rows * LANE
    base = i * block_elems
    group = tile_rows // ACC_ROWS

    def fold(v):
        # (tile_rows, 128) -> (8, 128): sublane-aligned VALU adds, no XLU.
        return jnp.sum(v.reshape(group, ACC_ROWS, LANE), axis=0)

    def shared(x, t):
        # One exp(-|x|) feeds the sigmoid and both BCE softplus terms.
        e = jnp.exp(-jnp.abs(x))
        log1pe = jnp.log1p(e)
        sp_neg = log1pe + jnp.maximum(-x, 0.0)   # softplus(-x) = -log(sigmoid(x))
        sp_pos = log1pe + jnp.maximum(x, 0.0)    # softplus(x)  = -log(1 - sigmoid(x))
        p = jnp.exp(-sp_neg)                     # sigmoid(x) with no divide
        # torch's binary_cross_entropy clamps log terms at -100.
        bce = (t * jnp.minimum(sp_neg, 100.0)
               + (1.0 - t) * jnp.minimum(sp_pos, 100.0))
        return p, bce

    is_full = base + block_elems <= n

    @pl.when(is_full)
    def _interior():
        # Fast path: every element of this block is valid — no mask machinery.
        x = x_ref[...].astype(jnp.float32)
        t = t_ref[...].astype(jnp.float32)
        p, bce = shared(x, t)
        inter_acc[...] += fold(p * t)
        total_acc[...] += fold(p + t)
        bce_acc[...] += fold(bce)

    @pl.when(jnp.logical_not(is_full))
    def _ragged():
        # Last block only: mask wrapper tail pad and Pallas partial-block pad
        # (unspecified contents — must not poison the sums).
        row_ids = lax.broadcasted_iota(jnp.int32, (tile_rows, LANE), 0)
        lane_ids = lax.broadcasted_iota(jnp.int32, (tile_rows, LANE), 1)
        valid = (base + row_ids * LANE + lane_ids) < n
        mf = valid.astype(jnp.float32)
        x = jnp.where(valid, x_ref[...].astype(jnp.float32), 0.0)
        t = jnp.where(valid, t_ref[...].astype(jnp.float32), 0.0)
        p, bce = shared(x, t)
        inter_acc[...] += fold(p * t)            # masked t == 0 already
        total_acc[...] += fold((p + t) * mf)
        bce_acc[...] += fold(bce * mf)

    # Single cross-lane reduce + SMEM scalar store at the very end.
    @pl.when(i == pl.num_programs(0) - 1)
    def _finalize():
        out_ref[0, 0] = jnp.sum(inter_acc[...])
        out_ref[0, 1] = jnp.sum(total_acc[...])
        out_ref[0, 2] = jnp.sum(bce_acc[...])


def iou_bce_loss(inputs, targets, smooth=1.0):
    """Pallas implementation of IoUBCELoss.forward (sigmoid + IoU + mean BCE)."""
    x = inputs.reshape(-1)          # keep native dtype; cast happens in-kernel
    t = targets.reshape(-1)
    n = x.shape[0]

    # Pad (at most 1023 elements, only if needed) so the stream reshapes to
    # (rows, 128) with rows a multiple of 8. Everything past n is masked
    # in-kernel, so the zero pad values never contribute.
    chunk = LANE * ACC_ROWS
    n_pad = ((n + chunk - 1) // chunk) * chunk
    if n_pad != n:
        x = jnp.pad(x, (0, n_pad - n))
        t = jnp.pad(t, (0, n_pad - n))
    rows = n_pad // LANE
    x2 = x.reshape(rows, LANE)
    t2 = t.reshape(rows, LANE)

    tile_rows = min(DEFAULT_TILE_ROWS, rows)
    num_blocks = (rows + tile_rows - 1) // tile_rows

    def in_index(i, n_sm):
        return (i, 0)

    kernel = functools.partial(_iou_bce_kernel, tile_rows=tile_rows)

    grid_spec = pltpu.PrefetchScalarGridSpec(
        num_scalar_prefetch=1,
        grid=(num_blocks,),
        in_specs=[pl.BlockSpec((tile_rows, LANE), in_index),
                  pl.BlockSpec((tile_rows, LANE), in_index)],
        out_specs=pl.BlockSpec((1, 3), lambda i, n_sm: (0, 0),
                               memory_space=pltpu.SMEM),
        scratch_shapes=[pltpu.VMEM((ACC_ROWS, LANE), jnp.float32)
                        for _ in range(3)],
    )

    cost = pl.CostEstimate(
        flops=20 * n_pad,
        transcendentals=3 * n_pad,
        bytes_accessed=(x2.size * x2.dtype.itemsize
                        + t2.size * t2.dtype.itemsize + 3 * 4),
    )

    sums = pl.pallas_call(
        kernel,
        out_shape=jax.ShapeDtypeStruct((1, 3), jnp.float32),
        grid_spec=grid_spec,
        compiler_params=pltpu.CompilerParams(
            dimension_semantics=("arbitrary",)),
        cost_estimate=cost,
    )(jnp.array([n], dtype=jnp.int32), x2, t2)

    # Tiny scalar epilogue in plain JAX.
    intersection, total, bce_sum = sums[0, 0], sums[0, 1], sums[0, 2]
    union = total - intersection
    IoU = -(intersection + smooth) / (union + smooth)
    BCE = bce_sum / n
    return BCE + IoU


def _reference(inputs, targets, smooth=1.0):
    p = jax.nn.sigmoid(inputs.reshape(-1).astype(jnp.float32))
    t = targets.reshape(-1).astype(jnp.float32)
    intersection = jnp.sum(p * t)
    total = jnp.sum(p + t)
    union = total - intersection
    IoU = -(intersection + smooth) / (union + smooth)
    bce = jnp.mean(-(t * jnp.maximum(jnp.log(p), -100.0)
                     + (1.0 - t) * jnp.maximum(jnp.log1p(-p), -100.0)))
    return bce + IoU


if __name__ == "__main__":
    key = jax.random.PRNGKey(0)
    k1, k2 = jax.random.split(key)
    # NCHW logits and binary targets, small shapes.
    inputs = jax.random.normal(k1, (2, 4, 16, 16), dtype=jnp.float32)
    targets = jax.random.bernoulli(k2, p=0.5, shape=(2, 4, 16, 16)).astype(
        jnp.float32)

    loss = jax.block_until_ready(iou_bce_loss(inputs, targets))

    ref = _reference(inputs, targets)
    assert jnp.allclose(loss, ref, atol=3e-5, rtol=3e-5), (loss, ref)

    print("KERNEL_OK")
</pallas_src>

<mosaic_0001>
module attributes {stable_mosaic.version = 11 : i64} {
  func.func @_iou_bce_kernel(%arg0: i32, %arg1: memref<1xi32, #tpu.memory_space<smem>>, %arg2: memref<16x128xf32, #tpu.memory_space<vmem>>, %arg3: memref<16x128xf32, #tpu.memory_space<vmem>>, %arg4: memref<1x3xf32, #tpu.memory_space<smem>>, %arg5: memref<8x128xf32, #tpu.memory_space<vmem>>, %arg6: memref<8x128xf32, #tpu.memory_space<vmem>>, %arg7: memref<8x128xf32, #tpu.memory_space<vmem>>) attributes {dimension_semantics = [#tpu.dimension_semantics<arbitrary>], iteration_bounds = array<i64: 1>, scalar_prefetch = 1 : i64, scratch_operands = 3 : i64, tpu.core_type = #tpu.core_type<tc>, window_params = [{transform_indices = @transform_0, window_bounds = array<i64: 16, 128>}, {transform_indices = @transform_1, window_bounds = array<i64: 16, 128>}, {transform_indices = @transform_2, window_bounds = array<i64: 1, 3>}]} {
    %c0_i32 = arith.constant 0 : i32
    %0 = arith.cmpi eq, %arg0, %c0_i32 : i32
    %1 = arith.extui %0 : i1 to i32
    %c0_i32_0 = arith.constant 0 : i32
    %2 = arith.cmpi ne, %1, %c0_i32_0 : i32
    scf.if %2 {
      %cst = arith.constant 0.000000e+00 : f32
      %15 = vector.broadcast %cst : f32 to vector<8x128xf32>
      %c0_6 = arith.constant 0 : index
      %c0_7 = arith.constant 0 : index
      %16 = vector.load %arg5[%c0_6, %c0_7] : memref<8x128xf32, #tpu.memory_space<vmem>>, vector<8x128xf32>
      tpu.vector_store %arg5[%c0_6, %c0_7], %15 {strides = array<i32>} : memref<8x128xf32, #tpu.memory_space<vmem>>, vector<8x128xf32>,
      %cst_8 = arith.constant 0.000000e+00 : f32
      %17 = vector.broadcast %cst_8 : f32 to vector<8x128xf32>
      %c0_9 = arith.constant 0 : index
      %c0_10 = arith.constant 0 : index
      %18 = vector.load %arg6[%c0_9, %c0_10] : memref<8x128xf32, #tpu.memory_space<vmem>>, vector<8x128xf32>
      tpu.vector_store %arg6[%c0_9, %c0_10], %17 {strides = array<i32>} : memref<8x128xf32, #tpu.memory_space<vmem>>, vector<8x128xf32>,
      %cst_11 = arith.constant 0.000000e+00 : f32
      %19 = vector.broadcast %cst_11 : f32 to vector<8x128xf32>
      %c0_12 = arith.constant 0 : index
      %c0_13 = arith.constant 0 : index
      %20 = vector.load %arg7[%c0_12, %c0_13] : memref<8x128xf32, #tpu.memory_space<vmem>>, vector<8x128xf32>
      tpu.vector_store %arg7[%c0_12, %c0_13], %19 {strides = array<i32>} : memref<8x128xf32, #tpu.memory_space<vmem>>, vector<8x128xf32>,
    } else {
    }
    %c0 = arith.constant 0 : index
    %3 = memref.load %arg1[%c0] : memref<1xi32, #tpu.memory_space<smem>>
    %c2048_i32 = arith.constant 2048 : i32
    %4 = arith.muli %arg0, %c2048_i32 : i32
    %c2048_i32_1 = arith.constant 2048 : i32
    %5 = arith.addi %4, %c2048_i32_1 : i32
    %6 = arith.cmpi sle, %5, %3 : i32
    %7 = arith.extui %6 : i1 to i32
    %c0_i32_2 = arith.constant 0 : i32
    %8 = arith.cmpi ne, %7, %c0_i32_2 : i32
    scf.if %8 {
      %c0_6 = arith.constant 0 : index
      %c0_7 = arith.constant 0 : index
      %15 = vector.load %arg2[%c0_6, %c0_7] : memref<16x128xf32, #tpu.memory_space<vmem>>, vector<16x128xf32>
      %c0_8 = arith.constant 0 : index
      %c0_9 = arith.constant 0 : index
      %16 = vector.load %arg3[%c0_8, %c0_9] : memref<16x128xf32, #tpu.memory_space<vmem>>, vector<16x128xf32>
      %17 = math.absf %15 : vector<16x128xf32>
      %cst = arith.constant 0.000000e+00 : f32
      %18 = vector.broadcast %cst : f32 to vector<16x128xf32>
      %19 = arith.subf %18, %17 : vector<16x128xf32>
      %20 = math.exp %19 : vector<16x128xf32>
      %21 = math.log1p %20 : vector<16x128xf32>
      %cst_10 = arith.constant 0.000000e+00 : f32
      %22 = vector.broadcast %cst_10 : f32 to vector<16x128xf32>
      %23 = arith.subf %22, %15 : vector<16x128xf32>
      %cst_11 = arith.constant 0.000000e+00 : f32
      %24 = vector.broadcast %cst_11 : f32 to vector<16x128xf32>
      %25 = arith.maximumf %23, %24 : vector<16x128xf32>
      %26 = arith.addf %21, %25 : vector<16x128xf32>
      %cst_12 = arith.constant 0.000000e+00 : f32
      %27 = vector.broadcast %cst_12 : f32 to vector<16x128xf32>
      %28 = arith.maximumf %15, %27 : vector<16x128xf32>
      %29 = arith.addf %21, %28 : vector<16x128xf32>
      %cst_13 = arith.constant 0.000000e+00 : f32
      %30 = vector.broadcast %cst_13 : f32 to vector<16x128xf32>
      %31 = arith.subf %30, %26 : vector<16x128xf32>
      %32 = math.exp %31 : vector<16x128xf32>
      %cst_14 = arith.constant 1.000000e+02 : f32
      %33 = vector.broadcast %cst_14 : f32 to vector<16x128xf32>
      %34 = arith.minimumf %26, %33 : vector<16x128xf32>
      %35 = arith.mulf %16, %34 : vector<16x128xf32>
      %cst_15 = arith.constant 1.000000e+00 : f32
      %36 = vector.broadcast %cst_15 : f32 to vector<16x128xf32>
      %37 = arith.subf %36, %16 : vector<16x128xf32>
      %cst_16 = arith.constant 1.000000e+02 : f32
      %38 = vector.broadcast %cst_16 : f32 to vector<16x128xf32>
      %39 = arith.minimumf %29, %38 : vector<16x128xf32>
      %40 = arith.mulf %37, %39 : vector<16x128xf32>
      %41 = arith.addf %35, %40 : vector<16x128xf32>
      %c0_17 = arith.constant 0 : index
      %c0_18 = arith.constant 0 : index
      %42 = vector.load %arg5[%c0_17, %c0_18] : memref<8x128xf32, #tpu.memory_space<vmem>>, vector<8x128xf32>
      %43 = arith.mulf %32, %16 : vector<16x128xf32>
      %44 = vector.shape_cast %43 : vector<16x128xf32> to vector<2x8x128xf32>
      %cst_19 = arith.constant dense<0.000000e+00> : vector<8x128xf32>
      %45 = vector.multi_reduction <add>, %44, %cst_19 [0] : vector<2x8x128xf32> to vector<8x128xf32>
      %46 = arith.addf %42, %45 : vector<8x128xf32>
      %c0_20 = arith.constant 0 : index
      %c0_21 = arith.constant 0 : index
      %47 = vector.load %arg5[%c0_20, %c0_21] : memref<8x128xf32, #tpu.memory_space<vmem>>, vector<8x128xf32>
      tpu.vector_store %arg5[%c0_20, %c0_21], %46 {strides = array<i32>} : memref<8x128xf32, #tpu.memory_space<vmem>>, vector<8x128xf32>,
      %c0_22 = arith.constant 0 : index
      %c0_23 = arith.constant 0 : index
      %48 = vector.load %arg6[%c0_22, %c0_23] : memref<8x128xf32, #tpu.memory_space<vmem>>, vector<8x128xf32>
      %49 = arith.addf %32, %16 : vector<16x128xf32>
      %50 = vector.shape_cast %49 : vector<16x128xf32> to vector<2x8x128xf32>
      %cst_24 = arith.constant dense<0.000000e+00> : vector<8x128xf32>
      %51 = vector.multi_reduction <add>, %50, %cst_24 [0] : vector<2x8x128xf32> to vector<8x128xf32>
      %52 = arith.addf %48, %51 : vector<8x128xf32>
      %c0_25 = arith.constant 0 : index
      %c0_26 = arith.constant 0 : index
      %53 = vector.load %arg6[%c0_25, %c0_26] : memref<8x128xf32, #tpu.memory_space<vmem>>, vector<8x128xf32>
      tpu.vector_store %arg6[%c0_25, %c0_26], %52 {strides = array<i32>} : memref<8x128xf32, #tpu.memory_space<vmem>>, vector<8x128xf32>,
      %c0_27 = arith.constant 0 : index
      %c0_28 = arith.constant 0 : index
      %54 = vector.load %arg7[%c0_27, %c0_28] : memref<8x128xf32, #tpu.memory_space<vmem>>, vector<8x128xf32>
      %55 = vector.shape_cast %41 : vector<16x128xf32> to vector<2x8x128xf32>
      %cst_29 = arith.constant dense<0.000000e+00> : vector<8x128xf32>
      %56 = vector.multi_reduction <add>, %55, %cst_29 [0] : vector<2x8x128xf32> to vector<8x128xf32>
      %57 = arith.addf %54, %56 : vector<8x128xf32>
      %c0_30 = arith.constant 0 : index
      %c0_31 = arith.constant 0 : index
      %58 = vector.load %arg7[%c0_30, %c0_31] : memref<8x128xf32, #tpu.memory_space<vmem>>, vector<8x128xf32>
      tpu.vector_store %arg7[%c0_30, %c0_31], %57 {strides = array<i32>} : memref<8x128xf32, #tpu.memory_space<vmem>>, vector<8x128xf32>,
    } else {
    }
    %true = arith.constant true
    %9 = arith.xori %6, %true : i1
    %10 = arith.extui %9 : i1 to i32
    %c0_i32_3 = arith.constant 0 : i32
    %11 = arith.cmpi ne, %10, %c0_i32_3 : i32
    scf.if %11 {
      %15 = tpu.iota {dimensions = array<i32: 0>} : vector<16x128xi32>
      %16 = tpu.iota {dimensions = array<i32: 1>} : vector<16x128xi32>
      %c128_i32 = arith.constant 128 : i32
      %17 = vector.broadcast %c128_i32 : i32 to vector<16x128xi32>
      %18 = arith.muli %15, %17 : vector<16x128xi32>
      %19 = vector.broadcast %4 : i32 to vector<16x128xi32>
      %20 = arith.addi %19, %18 : vector<16x128xi32>
      %21 = arith.addi %20, %16 : vector<16x128xi32>
      %22 = vector.broadcast %3 : i32 to vector<16x128xi32>
      %23 = arith.cmpi slt, %21, %22 : vector<16x128xi32>
      %24 = arith.extui %23 : vector<16x128xi1> to vector<16x128xi32>
      %25 = arith.sitofp %24 : vector<16x128xi32> to vector<16x128xf32>
      %c0_6 = arith.constant 0 : index
      %c0_7 = arith.constant 0 : index
      %26 = vector.load %arg2[%c0_6, %c0_7] : memref<16x128xf32, #tpu.memory_space<vmem>>, vector<16x128xf32>
      %cst = arith.constant 0.000000e+00 : f32
      %27 = vector.broadcast %cst : f32 to vector<16x128xf32>
      %28 = arith.select %23, %26, %27 : vector<16x128xi1>, vector<16x128xf32>
      %c0_8 = arith.constant 0 : index
      %c0_9 = arith.constant 0 : index
      %29 = vector.load %arg3[%c0_8, %c0_9] : memref<16x128xf32, #tpu.memory_space<vmem>>, vector<16x128xf32>
      %cst_10 = arith.constant 0.000000e+00 : f32
      %30 = vector.broadcast %cst_10 : f32 to vector<16x128xf32>
      %31 = arith.select %23, %29, %30 : vector<16x128xi1>, vector<16x128xf32>
      %32 = math.absf %28 : vector<16x128xf32>
      %cst_11 = arith.constant 0.000000e+00 : f32
      %33 = vector.broadcast %cst_11 : f32 to vector<16x128xf32>
      %34 = arith.subf %33, %32 : vector<16x128xf32>
      %35 = math.exp %34 : vector<16x128xf32>
      %36 = math.log1p %35 : vector<16x128xf32>
      %cst_12 = arith.constant 0.000000e+00 : f32
      %37 = vector.broadcast %cst_12 : f32 to vector<16x128xf32>
      %38 = arith.subf %37, %28 : vector<16x128xf32>
      %cst_13 = arith.constant 0.000000e+00 : f32
      %39 = vector.broadcast %cst_13 : f32 to vector<16x128xf32>
      %40 = arith.maximumf %38, %39 : vector<16x128xf32>
      %41 = arith.addf %36, %40 : vector<16x128xf32>
      %cst_14 = arith.constant 0.000000e+00 : f32
      %42 = vector.broadcast %cst_14 : f32 to vector<16x128xf32>
      %43 = arith.maximumf %28, %42 : vector<16x128xf32>
      %44 = arith.addf %36, %43 : vector<16x128xf32>
      %cst_15 = arith.constant 0.000000e+00 : f32
      %45 = vector.broadcast %cst_15 : f32 to vector<16x128xf32>
      %46 = arith.subf %45, %41 : vector<16x128xf32>
      %47 = math.exp %46 : vector<16x128xf32>
      %cst_16 = arith.constant 1.000000e+02 : f32
      %48 = vector.broadcast %cst_16 : f32 to vector<16x128xf32>
      %49 = arith.minimumf %41, %48 : vector<16x128xf32>
      %50 = arith.mulf %31, %49 : vector<16x128xf32>
      %cst_17 = arith.constant 1.000000e+00 : f32
      %51 = vector.broadcast %cst_17 : f32 to vector<16x128xf32>
      %52 = arith.subf %51, %31 : vector<16x128xf32>
      %cst_18 = arith.constant 1.000000e+02 : f32
      %53 = vector.broadcast %cst_18 : f32 to vector<16x128xf32>
      %54 = arith.minimumf %44, %53 : vector<16x128xf32>
      %55 = arith.mulf %52, %54 : vector<16x128xf32>
      %56 = arith.addf %50, %55 : vector<16x128xf32>
      %c0_19 = arith.constant 0 : index
      %c0_20 = arith.constant 0 : index
      %57 = vector.load %arg5[%c0_19, %c0_20] : memref<8x128xf32, #tpu.memory_space<vmem>>, vector<8x128xf32>
      %58 = arith.mulf %47, %31 : vector<16x128xf32>
      %59 = vector.shape_cast %58 : vector<16x128xf32> to vector<2x8x128xf32>
      %cst_21 = arith.constant dense<0.000000e+00> : vector<8x128xf32>
      %60 = vector.multi_reduction <add>, %59, %cst_21 [0] : vector<2x8x128xf32> to vector<8x128xf32>
      %61 = arith.addf %57, %60 : vector<8x128xf32>
      %c0_22 = arith.constant 0 : index
      %c0_23 = arith.constant 0 : index
      %62 = vector.load %arg5[%c0_22, %c0_23] : memref<8x128xf32, #tpu.memory_space<vmem>>, vector<8x128xf32>
      tpu.vector_store %arg5[%c0_22, %c0_23], %61 {strides = array<i32>} : memref<8x128xf32, #tpu.memory_space<vmem>>, vector<8x128xf32>,
      %c0_24 = arith.constant 0 : index
      %c0_25 = arith.constant 0 : index
      %63 = vector.load %arg6[%c0_24, %c0_25] : memref<8x128xf32, #tpu.memory_space<vmem>>, vector<8x128xf32>
      %64 = arith.addf %47, %31 : vector<16x128xf32>
      %65 = arith.mulf %64, %25 : vector<16x128xf32>
      %66 = vector.shape_cast %65 : vector<16x128xf32> to vector<2x8x128xf32>
      %cst_26 = arith.constant dense<0.000000e+00> : vector<8x128xf32>
      %67 = vector.multi_reduction <add>, %66, %cst_26 [0] : vector<2x8x128xf32> to vector<8x128xf32>
      %68 = arith.addf %63, %67 : vector<8x128xf32>
      %c0_27 = arith.constant 0 : index
      %c0_28 = arith.constant 0 : index
      %69 = vector.load %arg6[%c0_27, %c0_28] : memref<8x128xf32, #tpu.memory_space<vmem>>, vector<8x128xf32>
      tpu.vector_store %arg6[%c0_27, %c0_28], %68 {strides = array<i32>} : memref<8x128xf32, #tpu.memory_space<vmem>>, vector<8x128xf32>,
      %c0_29 = arith.constant 0 : index
      %c0_30 = arith.constant 0 : index
      %70 = vector.load %arg7[%c0_29, %c0_30] : memref<8x128xf32, #tpu.memory_space<vmem>>, vector<8x128xf32>
      %71 = arith.mulf %56, %25 : vector<16x128xf32>
      %72 = vector.shape_cast %71 : vector<16x128xf32> to vector<2x8x128xf32>
      %cst_31 = arith.constant dense<0.000000e+00> : vector<8x128xf32>
      %73 = vector.multi_reduction <add>, %72, %cst_31 [0] : vector<2x8x128xf32> to vector<8x128xf32>
      %74 = arith.addf %70, %73 : vector<8x128xf32>
      %c0_32 = arith.constant 0 : index
      %c0_33 = arith.constant 0 : index
      %75 = vector.load %arg7[%c0_32, %c0_33] : memref<8x128xf32, #tpu.memory_space<vmem>>, vector<8x128xf32>
      tpu.vector_store %arg7[%c0_32, %c0_33], %74 {strides = array<i32>} : memref<8x128xf32, #tpu.memory_space<vmem>>, vector<8x128xf32>,
    } else {
    }
    %c0_i32_4 = arith.constant 0 : i32
    %12 = arith.cmpi eq, %arg0, %c0_i32_4 : i32
    %13 = arith.extui %12 : i1 to i32
    %c0_i32_5 = arith.constant 0 : i32
    %14 = arith.cmpi ne, %13, %c0_i32_5 : i32
    scf.if %14 {
      %c0_6 = arith.constant 0 : index
      %c0_7 = arith.constant 0 : index
      %15 = vector.load %arg5[%c0_6, %c0_7] : memref<8x128xf32, #tpu.memory_space<vmem>>, vector<8x128xf32>
      %16 = vector.shape_cast %15 : vector<8x128xf32> to vector<1x8x128xf32>
      %cst = arith.constant dense<0.000000e+00> : vector<1xf32>
      %17 = vector.multi_reduction <add>, %16, %cst [1, 2] : vector<1x8x128xf32> to vector<1xf32>
      %18 = vector.shape_cast %17 : vector<1xf32> to vector<1x1x1xf32>
      %19 = vector.extract %18[0, 0, 0] : f32 from vector<1x1x1xf32>
      %c0_8 = arith.constant 0 : index
      %c0_9 = arith.constant 0 : index
      %20 = memref.load %arg4[%c0_8, %c0_9] : memref<1x3xf32, #tpu.memory_space<smem>>
      memref.store %19, %arg4[%c0_8, %c0_9] : memref<1x3xf32, #tpu.memory_space<smem>>
      %c0_10 = arith.constant 0 : index
      %c0_11 = arith.constant 0 : index
      %21 = vector.load %arg6[%c0_10, %c0_11] : memref<8x128xf32, #tpu.memory_space<vmem>>, vector<8x128xf32>
      %22 = vector.shape_cast %21 : vector<8x128xf32> to vector<1x8x128xf32>
      %cst_12 = arith.constant dense<0.000000e+00> : vector<1xf32>
      %23 = vector.multi_reduction <add>, %22, %cst_12 [1, 2] : vector<1x8x128xf32> to vector<1xf32>
      %24 = vector.shape_cast %23 : vector<1xf32> to vector<1x1x1xf32>
      %25 = vector.extract %24[0, 0, 0] : f32 from vector<1x1x1xf32>
      %c0_13 = arith.constant 0 : index
      %c1 = arith.constant 1 : index
      %26 = memref.load %arg4[%c0_13, %c1] : memref<1x3xf32, #tpu.memory_space<smem>>
      memref.store %25, %arg4[%c0_13, %c1] : memref<1x3xf32, #tpu.memory_space<smem>>
      %c0_14 = arith.constant 0 : index
      %c0_15 = arith.constant 0 : index
      %27 = vector.load %arg7[%c0_14, %c0_15] : memref<8x128xf32, #tpu.memory_space<vmem>>, vector<8x128xf32>
      %28 = vector.shape_cast %27 : vector<8x128xf32> to vector<1x8x128xf32>
      %cst_16 = arith.constant dense<0.000000e+00> : vector<1xf32>
      %29 = vector.multi_reduction <add>, %28, %cst_16 [1, 2] : vector<1x8x128xf32> to vector<1xf32>
      %30 = vector.shape_cast %29 : vector<1xf32> to vector<1x1x1xf32>
      %31 = vector.extract %30[0, 0, 0] : f32 from vector<1x1x1xf32>
      %c0_17 = arith.constant 0 : index
      %c2 = arith.constant 2 : index
      %32 = memref.load %arg4[%c0_17, %c2] : memref<1x3xf32, #tpu.memory_space<smem>>
      memref.store %31, %arg4[%c0_17, %c2] : memref<1x3xf32, #tpu.memory_space<smem>>
    } else {
    }
    return
  }
  func.func @transform_0(%arg0: i32, %arg1: memref<1xi32, #tpu.memory_space<smem>>) -> (i32, i32) {
    %c0_i32 = arith.constant 0 : i32
    %c0_i32_0 = arith.constant 0 : i32
    return %arg0, %c0_i32 : i32, i32
  }
  func.func @transform_1(%arg0: i32, %arg1: memref<1xi32, #tpu.memory_space<smem>>) -> (i32, i32) {
    %c0_i32 = arith.constant 0 : i32
    %c0_i32_0 = arith.constant 0 : i32
    return %arg0, %c0_i32 : i32, i32
  }
  func.func @transform_2(%arg0: i32, %arg1: memref<1xi32, #tpu.memory_space<smem>>) -> (i32, i32) {
    %c0_i32 = arith.constant 0 : i32
    %c0_i32_0 = arith.constant 0 : i32
    %c0_i32_1 = arith.constant 0 : i32
    return %c0_i32, %c0_i32_0 : i32, i32
  }
}

</mosaic_0001>

<llo_original>
// kernel: tpu_custom_call.1
$region0: #{tpu_custom_call.1}
  #allocation0 [shape = 'u32[]', space=smem, size = 0x4, offset = 0x4, fixed_abs, tag = 'smem constant byte address 0x4 - core index']
  #allocation1 [shape = 'u32[144,128]{1,0:T(1,128)}', space=vmem, size = 0x12000, scoped, tag = 'internal scratch']
  #allocation2 [shape = 'f32[8,128]{1,0:T(8,128)}', space=vmem, size = 0x1000, scoped, tag = 'scratch operand']
  #allocation3 [shape = 'f32[8,128]{1,0:T(8,128)}', space=vmem, size = 0x1000, scoped, tag = 'scratch operand']
  #allocation4 [shape = 'f32[8,128]{1,0:T(8,128)}', space=vmem, size = 0x1000, scoped, tag = 'scratch operand']
  #allocation5 [shape = 's32[1]{0}', space=sflag, size = 0x4, scoped, tag = 'scoped memory for tpu_custom_call.1']
  #allocation6 [shape = 's32[1]{0:T(128)S(6)}', space=smem, size = 0x200, scoped, tag = 'prefetched SMEM operand 0']
  %s0 = inlined_call_operand.<no memory space> [shape: s32[1], index: 0, kind: input, shape index: {}]
  %s1 = inlined_call_operand.hbm [shape: f32[16,128], index: 1, kind: input, shape index: {}]
  %s2 = inlined_call_operand.hbm [shape: f32[16,128], index: 2, kind: input, shape index: {}]
  %s3 = inlined_call_operand.hbm [shape: f32[1,3], index: 3, kind: output, shape index: {}]
  %s4 = sld [smem:[#allocation0]]
  $region42: #{tpu_custom_call.1} parent=0
    _
  %s6 = ssub.s32 1, %s4
  %s7 = scalar_select 0, %s6, %s4
  %8 = sst [smem:[#allocation6]] %s0
  $region1: #{tpu_custom_call.1} parent=0
    #allocation7 [shape = 'u8[8192]{0}', space=vmem, size = 0x2000, scoped, tag = 'input window, operand 1, single buffered']
    #allocation8 [shape = 's32[1]{0}', space=sflag, size = 0x4, scoped, tag = 'scoped memory for tpu_custom_call.1']
    #allocation9 [shape = 's32[1]{0}', space=sflag, size = 0x4, scoped, tag = 'scoped memory for tpu_custom_call.1']
    #allocation10 [shape = 'u8[8192]{0}', space=vmem, size = 0x2000, scoped, tag = 'input window, operand 2, single buffered']
    #allocation11 [shape = 's32[1]{0}', space=sflag, size = 0x4, scoped, tag = 'scoped memory for tpu_custom_call.1']
    #allocation12 [shape = 'u8[512]{0}', space=smem, size = 0x200, scoped, tag = 'output window, operand 0, single buffered']
    %9 = vsyncpa [#allocation8], 0
    %10 = vsyncpa [#allocation11], 0
    %11 = vsyncpa [#allocation9], 0
    // Predicated region
    $region2: #{tpu_custom_call.1} parent=1 // pred_check
      _
    $region3: #{tpu_custom_call.1} parent=1 // pred_check_branch
      %13 = sbr.rel (0) target = $region5
    $region4: #{tpu_custom_call.1} parent=1 // pred_region
      %s15 = ssub.s32 256, 256
      %16 = vsyncadd [#allocation8], %s15
      %s17 = sshll.u32 [#allocation7], 4
      %s18 = int_to_ptr.vmem [resolvable:$true] %s17
      %23 = dma.hbm_to_vmem [thread:$0]  %s1, 256, %s18, [#allocation8], 128, 128, 8
    $region5: #{tpu_custom_call.1} parent=1 // pred_fallthru
      _
    // Predicated region
    $region6: #{tpu_custom_call.1} parent=1 // pred_check
      _
    $region7: #{tpu_custom_call.1} parent=1 // pred_check_branch
      %25 = sbr.rel (0) target = $region9
    $region8: #{tpu_custom_call.1} parent=1 // pred_region
      %s27 = ssub.s32 256, 256
      %28 = vsyncadd [#allocation11], %s27
      %s29 = sshll.u32 [#allocation10], 4
      %s30 = int_to_ptr.vmem [resolvable:$true] %s29
      %35 = dma.hbm_to_vmem [thread:$0]  %s2, 256, %s30, [#allocation11], 128, 128, 8
    $region9: #{tpu_custom_call.1} parent=1 // pred_fallthru
      _
    // Predicated region
    $region10: #{tpu_custom_call.1} parent=1 // pred_check
      _
    $region11: #{tpu_custom_call.1} parent=1 // pred_check_branch
      %37 = sbr.rel (0) target = $region13
    $region12: #{tpu_custom_call.1} parent=1 // pred_region
      %38 = dma.done [#allocation8], 256
    $region13: #{tpu_custom_call.1} parent=1 // pred_fallthru
      _
    // Predicated region
    $region14: #{tpu_custom_call.1} parent=1 // pred_check
      _
    $region15: #{tpu_custom_call.1} parent=1 // pred_check_branch
      %40 = sbr.rel (0) target = $region17
    $region16: #{tpu_custom_call.1} parent=1 // pred_region
      %41 = dma.done [#allocation11], 256
    $region17: #{tpu_custom_call.1} parent=1 // pred_fallthru
      _
    %p42 = scmp.eq.s32.totalorder 0, 0
    // Predicated region
    $region18: #{tpu_custom_call.1} parent=1 // pred_check
      %p43 = pneg %p42
    $region19: #{tpu_custom_call.1} parent=1 // pred_check_branch
      %45 = sbr.rel (%p43) target = $region21
    $region20: #{tpu_custom_call.1} parent=1 // pred_region
      %46 = vst [vmem:[#allocation2] sm:$0xff] 0.0
      %47 = vst [vmem:[#allocation3] sm:$0xff] 0.0
      %48 = vst [vmem:[#allocation4] sm:$0xff] 0.0
    $region21: #{tpu_custom_call.1} parent=1 // pred_fallthru
      _
    %s49 = sld [smem:[#allocation6]]
    %s50 = smul.u32 0, 2048
    %s51 = sadd.s32 %s50, 2048
    %p52 = scmp.le.s32.totalorder %s51, %s49
    // Predicated region
    $region22: #{tpu_custom_call.1} parent=1 // pred_check
      %p53 = pneg %p52
    $region23: #{tpu_custom_call.1} parent=1 // pred_check_branch
      %55 = sbr.rel (%p53) target = $region25
    $region24: #{tpu_custom_call.1} parent=1 // pred_region
      %v56 = vld [vmem:[#allocation7] sm:$0xff]
      %v57 = vld [vmem:[#allocation7 + $0x8] sm:$0xff]
      %v58 = vld [vmem:[#allocation10] sm:$0xff]
      %v59 = vld [vmem:[#allocation10 + $0x8] sm:$0xff]
      %v60 = vand.u32 2147483647, %v56
      %v61 = vand.u32 2147483647, %v57
      %v62 = vsub.f32 0.0, %v60
      %v63 = vsub.f32 0.0, %v61
      %v64 = vmul.f32 %v62, 1.442695
      %v65 = vpow.pop %v64
      %v66 = vmul.f32 %v63, 1.442695
      %v67 = vpow.pop %v66
      %v68 = vadd.f32 %v65, 1.0
      %v69 = vlog2.pop %v68
      %v70 = vmul.f32 %v69, 0.6931472
      %v71 = vmul.f32 -0.5, %v65
      %v72 = vadd.f32 %v71, 1.0
      %v73 = vmul.f32 %v72, %v65
      %v74 = vand.u32 2147483647, %v65
      %vm75 = vcmp.lt.f32.partialorder %v74, 0.0004427343
      %v76 = vsel %vm75, %v73, %v70
      %v77 = vadd.f32 %v67, 1.0
      %v78 = vlog2.pop %v77
      %v79 = vmul.f32 %v78, 0.6931472
      %v80 = vmul.f32 -0.5, %v67
      %v81 = vadd.f32 %v80, 1.0
      %v82 = vmul.f32 %v81, %v67
      %v83 = vand.u32 2147483647, %v67
      %vm84 = vcmp.lt.f32.partialorder %v83, 0.0004427343
      %v85 = vsel %vm84, %v82, %v79
      %v86 = vsub.f32 0.0, %v56
      %v87 = vsub.f32 0.0, %v57
      %v88 = vmax.f32 %v86, 0.0
      %v89 = vmax.f32 %v87, 0.0
      %v90 = vadd.f32 %v76, %v88
      %v91 = vadd.f32 %v85, %v89
      %v92 = vmax.f32 %v56, 0.0
      %v93 = vmax.f32 %v57, 0.0
      %v94 = vadd.f32 %v76, %v92
      %v95 = vadd.f32 %v85, %v93
      %v96 = vsub.f32 0.0, %v90
      %v97 = vsub.f32 0.0, %v91
      %v98 = vmul.f32 %v96, 1.442695
      %v99 = vpow.pop %v98
      %v100 = vmul.f32 %v97, 1.442695
      %v101 = vpow.pop %v100
      %v102 = vmin.f32 %v90, 100.0
      %v103 = vmin.f32 %v91, 100.0
      %v104 = vmul.f32 %v58, %v102
      %v105 = vmul.f32 %v59, %v103
      %v106 = vsub.f32 1.0, %v58
      %v107 = vsub.f32 1.0, %v59
      %v108 = vmin.f32 %v94, 100.0
      %v109 = vmin.f32 %v95, 100.0
      %v110 = vmul.f32 %v106, %v108
      %v111 = vmul.f32 %v107, %v109
      %v112 = vadd.f32 %v104, %v110
      %v113 = vadd.f32 %v105, %v111
      %v114 = vld [vmem:[#allocation2] sm:$0xff]
      %v115 = vmul.f32 %v99, %v58
      %v116 = vmul.f32 %v101, %v59
      %v117 = vadd.f32 %v115, %v116
      %v118 = vadd.f32 %v114, %v117
      %119 = vst [vmem:[#allocation2] sm:$0xff] %v118
      %v120 = vld [vmem:[#allocation3] sm:$0xff]
      %v121 = vadd.f32 %v99, %v58
      %v122 = vadd.f32 %v101, %v59
      %v123 = vadd.f32 %v121, %v122
      %v124 = vadd.f32 %v120, %v123
      %125 = vst [vmem:[#allocation3] sm:$0xff] %v124
      %v126 = vld [vmem:[#allocation4] sm:$0xff]
      %v127 = vadd.f32 %v112, %v113
      %v128 = vadd.f32 %v126, %v127
      %129 = vst [vmem:[#allocation4] sm:$0xff] %v128
    $region25: #{tpu_custom_call.1} parent=1 // pred_fallthru
      _
    %p130 = scmp.gt.s32.totalorder %s51, %s49
    // Predicated region
    $region26: #{tpu_custom_call.1} parent=1 // pred_check
      %p131 = pneg %p130
    $region27: #{tpu_custom_call.1} parent=1 // pred_check_branch
      %133 = sbr.rel (%p131) target = $region29
    $region28: #{tpu_custom_call.1} parent=1 // pred_region
      %v134 = vlaneseq
      %v135 = vshrl.u32 %v134, 7
      %v136 = vadd.s32 %v135, 8
      %v137 = vlaneseq
      %v138 = vand.u32 %v137, 127
      %v139 = vmul.u32 %v135, 128
      %v140 = vmul.u32 %v136, 128
      %v141 = vstv %s50
      %v142 = vadd.s32 %v141, %v139
      %v143 = vadd.s32 %v141, %v140
      %v144 = vadd.s32 %v142, %v138
      %v145 = vadd.s32 %v143, %v138
      %v146 = vstv %s49
      %vm147 = vcmp.lt.s32.totalorder %v144, %v146
      %vm148 = vcmp.lt.s32.totalorder %v145, %v146
      %v149 = vsel %vm147, 1, 0
      %v150 = vsel %vm148, 1, 0
      %v151 = vcvt.s32.f32 %v149
      %v152 = vcvt.s32.f32 %v150
      %v153 = vld [vmem:[#allocation7] sm:$0xff]
      %v154 = vld [vmem:[#allocation7 + $0x8] sm:$0xff]
      %v155 = vsel %vm147, %v153, 0.0
      %v156 = vsel %vm148, %v154, 0.0
      %v157 = vld [vmem:[#allocation10] sm:$0xff]
      %v158 = vld [vmem:[#allocation10 + $0x8] sm:$0xff]
      %v159 = vsel %vm147, %v157, 0.0
      %v160 = vsel %vm148, %v158, 0.0
      %v161 = vand.u32 2147483647, %v155
      %v162 = vand.u32 2147483647, %v156
      %v163 = vsub.f32 0.0, %v161
      %v164 = vsub.f32 0.0, %v162
      %v165 = vmul.f32 %v163, 1.442695
      %v166 = vpow.pop %v165
      %v167 = vmul.f32 %v164, 1.442695
      %v168 = vpow.pop %v167
      %v169 = vadd.f32 %v166, 1.0
      %v170 = vlog2.pop %v169
      %v171 = vmul.f32 %v170, 0.6931472
      %v172 = vmul.f32 -0.5, %v166
      %v173 = vadd.f32 %v172, 1.0
      %v174 = vmul.f32 %v173, %v166
      %v175 = vand.u32 2147483647, %v166
      %vm176 = vcmp.lt.f32.partialorder %v175, 0.0004427343
      %v177 = vsel %vm176, %v174, %v171
      %v178 = vadd.f32 %v168, 1.0
      %v179 = vlog2.pop %v178
      %v180 = vmul.f32 %v179, 0.6931472
      %v181 = vmul.f32 -0.5, %v168
      %v182 = vadd.f32 %v181, 1.0
      %v183 = vmul.f32 %v182, %v168
      %v184 = vand.u32 2147483647, %v168
      %vm185 = vcmp.lt.f32.partialorder %v184, 0.0004427343
      %v186 = vsel %vm185, %v183, %v180
      %v187 = vsub.f32 0.0, %v155
      %v188 = vsub.f32 0.0, %v156
      %v189 = vmax.f32 %v187, 0.0
      %v190 = vmax.f32 %v188, 0.0
      %v191 = vadd.f32 %v177, %v189
      %v192 = vadd.f32 %v186, %v190
      %v193 = vmax.f32 %v155, 0.0
      %v194 = vmax.f32 %v156, 0.0
      %v195 = vadd.f32 %v177, %v193
      %v196 = vadd.f32 %v186, %v194
      %v197 = vsub.f32 0.0, %v191
      %v198 = vsub.f32 0.0, %v192
      %v199 = vmul.f32 %v197, 1.442695
      %v200 = vpow.pop %v199
      %v201 = vmul.f32 %v198, 1.442695
      %v202 = vpow.pop %v201
      %v203 = vmin.f32 %v191, 100.0
      %v204 = vmin.f32 %v192, 100.0
      %v205 = vmul.f32 %v159, %v203
      %v206 = vmul.f32 %v160, %v204
      %v207 = vsub.f32 1.0, %v159
      %v208 = vsub.f32 1.0, %v160
      %v209 = vmin.f32 %v195, 100.0
      %v210 = vmin.f32 %v196, 100.0
      %v211 = vmul.f32 %v207, %v209
      %v212 = vmul.f32 %v208, %v210
      %v213 = vadd.f32 %v205, %v211
      %v214 = vadd.f32 %v206, %v212
      %v215 = vld [vmem:[#allocation2] sm:$0xff]
      %v216 = vmul.f32 %v200, %v159
      %v217 = vmul.f32 %v202, %v160
      %v218 = vadd.f32 %v216, %v217
      %v219 = vadd.f32 %v215, %v218
      %220 = vst [vmem:[#allocation2] sm:$0xff] %v219
      %v221 = vld [vmem:[#allocation3] sm:$0xff]
      %v222 = vadd.f32 %v200, %v159
      %v223 = vadd.f32 %v202, %v160
      %v224 = vmul.f32 %v222, %v151
      %v225 = vmul.f32 %v223, %v152
      %v226 = vadd.f32 %v224, %v225
      %v227 = vadd.f32 %v221, %v226
      %228 = vst [vmem:[#allocation3] sm:$0xff] %v227
      %v229 = vld [vmem:[#allocation4] sm:$0xff]
      %v230 = vmul.f32 %v213, %v151
      %v231 = vmul.f32 %v214, %v152
      %v232 = vadd.f32 %v230, %v231
      %v233 = vadd.f32 %v229, %v232
      %234 = vst [vmem:[#allocation4] sm:$0xff] %v233
    $region29: #{tpu_custom_call.1} parent=1 // pred_fallthru
      _
    // Predicated region
    $region30: #{tpu_custom_call.1} parent=1 // pred_check
      %p235 = pneg %p42
    $region31: #{tpu_custom_call.1} parent=1 // pred_check_branch
      %237 = sbr.rel (%p235) target = $region33
    $region32: #{tpu_custom_call.1} parent=1 // pred_region
      %v238 = vld [vmem:[#allocation2] sm:$0xff]
      %239 = vadd.xlane.f32.xlu0 %v238
      %v240 = vpop.xlane.xlu0 %239
      %v241 = vrot.slane %v240, 4
      %v242 = vadd.f32 %v240, %v241
      %v243 = vrot.slane %v242, 2
      %v244 = vadd.f32 %v242, %v243
      %v245 = vrot.slane %v244, 1
      %v246 = vadd.f32 %v244, %v245
      %s247 = vtos %v246
      %s248 = scalar_lea.smem [#allocation12], 0
      %249 = sst [smem:[%s248]] %s247
      %v250 = vld [vmem:[#allocation3] sm:$0xff]
      %251 = vadd.xlane.f32.xlu0 %v250
      %v252 = vpop.xlane.xlu0 %251
      %v253 = vrot.slane %v252, 4
      %v254 = vadd.f32 %v252, %v253
      %v255 = vrot.slane %v254, 2
      %v256 = vadd.f32 %v254, %v255
      %v257 = vrot.slane %v256, 1
      %v258 = vadd.f32 %v256, %v257
      %s259 = vtos %v258
      %s260 = scalar_lea.smem [#allocation12], 1
      %261 = sst [smem:[%s260]] %s259
      %v262 = vld [vmem:[#allocation4] sm:$0xff]
      %263 = vadd.xlane.f32.xlu0 %v262
      %v264 = vpop.xlane.xlu0 %263
      %v265 = vrot.slane %v264, 4
      %v266 = vadd.f32 %v264, %v265
      %v267 = vrot.slane %v266, 2
      %v268 = vadd.f32 %v266, %v267
      %v269 = vrot.slane %v268, 1
      %v270 = vadd.f32 %v268, %v269
      %s271 = vtos %v270
      %s272 = scalar_lea.smem [#allocation12], 2
      %273 = sst [smem:[%s272]] %s271
    $region33: #{tpu_custom_call.1} parent=1 // pred_fallthru
      _
    // Predicated region
    $region34: #{tpu_custom_call.1} parent=1 // pred_check
      _
    $region35: #{tpu_custom_call.1} parent=1 // pred_check_branch
      %275 = sbr.rel (0) target = $region37
    $region36: #{tpu_custom_call.1} parent=1 // pred_region
      %s277 = ssub.s32 16, 16
      %278 = vsyncadd [#allocation9], %s277
      %281 = dma.smem_to_hbm [#allocation12], 16, %s3, [#allocation9]
    $region37: #{tpu_custom_call.1} parent=1 // pred_fallthru
      _
    // Predicated region
    $region38: #{tpu_custom_call.1} parent=1 // pred_check
      _
    $region39: #{tpu_custom_call.1} parent=1 // pred_check_branch
      %283 = sbr.rel (0) target = $region41
    $region40: #{tpu_custom_call.1} parent=1 // pred_region
      %284 = dma.done [#allocation9], 16
    $region41: #{tpu_custom_call.1} parent=1 // pred_fallthru
      _
    %285 = sfence
    %286 = vsyncpa [#allocation8], 1
    %287 = vsyncpa [#allocation11], 1
    %288 = vsyncpa [#allocation9], 1

</llo_original>
